<compile_context>
chip_gen: v7x
topology: tpu7x:2x2x1
jax: 0.10.0
libtpu: 0.0.40
codegen_flags: <defaults>
</compile_context>

<pallas_src>
import jax
import jax.numpy as jnp
from jax.experimental import pallas as pl
from jax.experimental.pallas import tpu as pltpu


def _resblock_kernel(x_ref, w1_ref, b1_ref, w2_ref, b2_ref, o_ref):
    """One lane-dense spatial tile of one batch element per grid step.

    x_ref : (C, TP)   channels on sublanes, pixels on lanes
    w1_ref: (2C, C)   conv1 1x1 weight, (out, in)  -- resident across the grid
    b1_ref: (2C, 1)   conv1 bias (broadcast over lanes)
    w2_ref: (C, 2C)   conv2 1x1 weight
    b2_ref: (C, 1)    conv2 bias
    o_ref : (C, TP)   output tile
    """
    x = x_ref[...]
    h = jnp.dot(w1_ref[...], x, preferred_element_type=jnp.float32) + b1_ref[...]
    h = jnp.maximum(h, 0.0)                                   # ReLU
    y = jnp.dot(w2_ref[...], h, preferred_element_type=jnp.float32) + b2_ref[...]
    o_ref[...] = (y + x.astype(jnp.float32)).astype(o_ref.dtype)  # + residual


def _vmem_budget_bytes():
    """Conservative per-pipeline VMEM budget that is safe on v5e/v6e/v7x."""
    try:
        cap = pltpu.get_tpu_info().vmem_capacity_bytes
    except Exception:
        cap = 64 << 20  # v7x physical per-TC, the smallest of the three gens
    return min(cap // 4, 16 << 20)


def _pick_spatial_tile(P, N, C, itemsize):
    """Lane-aligned spatial tile size (multiple of 128).

    Bounded by (a) a 1024-lane compute cap so x/h/y temporaries fit the vreg
    file, (b) the VMEM budget for the double-buffered in+out activation blocks,
    (c) the (padded) spatial extent, and shrunk so the total grid has >= 4
    steps when possible (pipelining + v7x megacore).
    """
    budget = _vmem_budget_bytes()
    # double-buffered input + output activation blocks must stay under ~budget
    max_tp_vmem = max(128, budget // (4 * C * itemsize))
    tp = min(1024, max_tp_vmem)
    tp = max(128, (tp // 128) * 128)

    p_pad = ((P + 127) // 128) * 128
    tp = min(tp, p_pad)
    tp = max(128, (tp // 128) * 128)

    # Guarantee >= 4 grid steps (ideal for pipelining and both v7x cores)
    # whenever the problem is big enough to allow it.
    while tp > 128 and N * pl.cdiv(P, tp) < 4:
        tp = max(128, ((tp // 2) // 128) * 128)
    return tp


def resblock_pallas(x_nchw, w1, b1, w2, b2, *, spatial_tile=None):
    """x_nchw: (N, C, H, W); w1: (2C, C, 1, 1); b1: (2C,); w2: (C, 2C, 1, 1); b2: (C,)."""
    N, C, H, W = x_nchw.shape
    C2 = w1.shape[0]
    P = H * W
    itemsize = jnp.dtype(x_nchw.dtype).itemsize
    TP = spatial_tile or _pick_spatial_tile(P, N, C, itemsize)
    num_tiles = pl.cdiv(P, TP)

    # Free reshapes (contiguous), no data movement in HBM.
    x_flat = x_nchw.reshape(N, C, P)
    w1_mat = w1.reshape(C2, C)
    w2_mat = w2.reshape(C, C2)
    b1_col = b1.reshape(C2, 1)
    b2_col = b2.reshape(C, 1)

    # Raise the scoped VMEM limit only if the pipelined working set would not
    # fit the most conservative default (v5e: 16 MiB scoped).
    act_bytes = 2 * 2 * C * TP * itemsize            # double-buffered in + out
    wgt_bytes = 2 * (C2 * C + C * C2 + C2 + C) * 4   # resident weights/biases
    est_bytes = act_bytes + wgt_bytes
    cp_kwargs = dict(dimension_semantics=("parallel", "parallel"))
    if est_bytes > (12 << 20):
        cp_kwargs["vmem_limit_bytes"] = min(int(est_bytes * 2), 48 << 20)

    out_flat = pl.pallas_call(
        _resblock_kernel,
        out_shape=jax.ShapeDtypeStruct((N, C, P), x_nchw.dtype),
        grid=(N, num_tiles),
        in_specs=[
            pl.BlockSpec((None, C, TP), lambda n, p: (n, 0, p)),  # activations
            pl.BlockSpec((C2, C), lambda n, p: (0, 0)),           # W1 (resident)
            pl.BlockSpec((C2, 1), lambda n, p: (0, 0)),           # b1
            pl.BlockSpec((C, C2), lambda n, p: (0, 0)),           # W2
            pl.BlockSpec((C, 1), lambda n, p: (0, 0)),            # b2
        ],
        out_specs=pl.BlockSpec((None, C, TP), lambda n, p: (n, 0, p)),
        compiler_params=pltpu.CompilerParams(**cp_kwargs),
        # TODO(synk): when this block is chained many times, pass
        # input_output_aliases={0: 0} so y overwrites x in HBM (saves an
        # allocation / copy); omitted here so the test inputs stay live.
    )(x_flat, w1_mat, b1_col, w2_mat, b2_col)

    return out_flat.reshape(N, C, H, W)


def resblock_reference(x_nchw, w1, b1, w2, b2):
    """Plain-JAX reference of the PyTorch ResBlock forward (1x1 convs)."""
    C = x_nchw.shape[1]
    C2 = w1.shape[0]
    w1m = w1.reshape(C2, C)
    w2m = w2.reshape(C, C2)
    h = jnp.einsum("oc,nchw->nohw", w1m, x_nchw) + b1.reshape(1, C2, 1, 1)
    h = jnp.maximum(h, 0.0)
    y = jnp.einsum("co,nohw->nchw", w2m, h) + b2.reshape(1, C, 1, 1)
    return y + x_nchw


if __name__ == "__main__":
    # ResBlock(n_feats=8): Conv2d(8->16, 1x1) -> ReLU -> Conv2d(16->8, 1x1) -> +x
    N, C, H, W = 2, 8, 16, 16
    C2 = 2 * C

    key = jax.random.PRNGKey(0)
    kx, kw1, kb1, kw2, kb2 = jax.random.split(key, 5)

    w1 = 0.1 * jax.random.normal(kw1, (C2, C, 1, 1), jnp.float32)  # PyTorch layout
    b1 = 0.1 * jax.random.normal(kb1, (C2,), jnp.float32)
    w2 = 0.1 * jax.random.normal(kw2, (C, C2, 1, 1), jnp.float32)
    b2 = 0.1 * jax.random.normal(kb2, (C,), jnp.float32)

    # Case 1: spatial size a multiple of 128 (256 pixels -> 4 grid steps).
    x = jax.random.normal(kx, (N, C, H, W), jnp.float32)
    out = jax.block_until_ready(resblock_pallas(x, w1, b1, w2, b2))
    ref = resblock_reference(x, w1, b1, w2, b2)
    assert out.shape == (N, C, H, W)
    err = float(jnp.max(jnp.abs(out - ref)))
    assert err < 1e-4, f"max abs err {err}"

    # Case 2: ragged spatial size (13x13 = 169 pixels, not a multiple of 128):
    # exercises the pl.cdiv grid with a padded final tile (OOB lanes are
    # computed on garbage but never written back).
    Hr = Wr = 13
    xr = jax.random.normal(kx, (N, C, Hr, Wr), jnp.float32)
    out_r = jax.block_until_ready(resblock_pallas(xr, w1, b1, w2, b2))
    ref_r = resblock_reference(xr, w1, b1, w2, b2)
    err_r = float(jnp.max(jnp.abs(out_r - ref_r)))
    assert err_r < 1e-4, f"ragged max abs err {err_r}"

    print("KERNEL_OK")
</pallas_src>

<mosaic_0001>
module attributes {stable_mosaic.version = 11 : i64} {
  func.func @_resblock_kernel(%arg0: i32, %arg1: i32, %arg2: memref<1x8x128xf32, #tpu.memory_space<vmem>>, %arg3: memref<16x8xf32, #tpu.memory_space<vmem>>, %arg4: memref<16x1xf32, #tpu.memory_space<vmem>>, %arg5: memref<8x16xf32, #tpu.memory_space<vmem>>, %arg6: memref<8x1xf32, #tpu.memory_space<vmem>>, %arg7: memref<1x8x128xf32, #tpu.memory_space<vmem>>) attributes {dimension_semantics = [#tpu.dimension_semantics<parallel>, #tpu.dimension_semantics<parallel>], iteration_bounds = array<i64: 2, 2>, scalar_prefetch = 0 : i64, scratch_operands = 0 : i64, tpu.core_type = #tpu.core_type<tc>, window_params = [{transform_indices = @transform_0, window_bounds = array<i64: 1, 8, 128>}, {pipeline_mode = #tpu.pipeline_mode<synchronous>, transform_indices = @transform_1, window_bounds = array<i64: 16, 8>}, {pipeline_mode = #tpu.pipeline_mode<synchronous>, transform_indices = @transform_2, window_bounds = array<i64: 16, 1>}, {pipeline_mode = #tpu.pipeline_mode<synchronous>, transform_indices = @transform_3, window_bounds = array<i64: 8, 16>}, {pipeline_mode = #tpu.pipeline_mode<synchronous>, transform_indices = @transform_4, window_bounds = array<i64: 8, 1>}, {transform_indices = @transform_5, window_bounds = array<i64: 1, 8, 128>}]} {
    %c0 = arith.constant 0 : index
    %c0_0 = arith.constant 0 : index
    %c0_1 = arith.constant 0 : index
    %0 = vector.load %arg2[%c0, %c0_0, %c0_1] : memref<1x8x128xf32, #tpu.memory_space<vmem>>, vector<1x8x128xf32>
    %1 = vector.shape_cast %0 : vector<1x8x128xf32> to vector<8x128xf32>
    %c0_2 = arith.constant 0 : index
    %c0_3 = arith.constant 0 : index
    %2 = vector.load %arg3[%c0_2, %c0_3] : memref<16x8xf32, #tpu.memory_space<vmem>>, vector<16x8xf32>
    %cst = arith.constant dense<0.000000e+00> : vector<16x128xf32>
    %3 = tpu.matmul %2, %1, %cst {dimension_numbers = #tpu.dot_dimension_numbers<[1], [0], [0], [1], [0, 0, 1, 1], [], []>} : vector<16x8xf32>, vector<8x128xf32>, vector<16x128xf32> -> vector<16x128xf32>
    %c0_4 = arith.constant 0 : index
    %c0_5 = arith.constant 0 : index
    %4 = vector.load %arg4[%c0_4, %c0_5] : memref<16x1xf32, #tpu.memory_space<vmem>>, vector<16x1xf32>
    %5 = vector.broadcast %4 : vector<16x1xf32> to vector<16x128xf32>
    %6 = arith.addf %3, %5 : vector<16x128xf32>
    %cst_6 = arith.constant 0.000000e+00 : f32
    %7 = vector.broadcast %cst_6 : f32 to vector<16x128xf32>
    %8 = arith.maximumf %6, %7 : vector<16x128xf32>
    %c0_7 = arith.constant 0 : index
    %c0_8 = arith.constant 0 : index
    %9 = vector.load %arg5[%c0_7, %c0_8] : memref<8x16xf32, #tpu.memory_space<vmem>>, vector<8x16xf32>
    %cst_9 = arith.constant dense<0.000000e+00> : vector<8x128xf32>
    %10 = tpu.matmul %9, %8, %cst_9 {dimension_numbers = #tpu.dot_dimension_numbers<[1], [0], [0], [1], [0, 0, 1, 1], [], []>} : vector<8x16xf32>, vector<16x128xf32>, vector<8x128xf32> -> vector<8x128xf32>
    %c0_10 = arith.constant 0 : index
    %c0_11 = arith.constant 0 : index
    %11 = vector.load %arg6[%c0_10, %c0_11] : memref<8x1xf32, #tpu.memory_space<vmem>>, vector<8x1xf32>
    %12 = vector.broadcast %11 : vector<8x1xf32> to vector<8x128xf32>
    %13 = arith.addf %10, %12 : vector<8x128xf32>
    %14 = arith.addf %13, %1 : vector<8x128xf32>
    %c0_12 = arith.constant 0 : index
    %c0_13 = arith.constant 0 : index
    %c0_14 = arith.constant 0 : index
    %15 = vector.load %arg7[%c0_12, %c0_13, %c0_14] : memref<1x8x128xf32, #tpu.memory_space<vmem>>, vector<1x8x128xf32>
    %16 = vector.shape_cast %15 : vector<1x8x128xf32> to vector<8x128xf32>
    %17 = vector.shape_cast %14 : vector<8x128xf32> to vector<1x8x128xf32>
    tpu.vector_store %arg7[%c0_12, %c0_13, %c0_14], %17 {strides = array<i32>} : memref<1x8x128xf32, #tpu.memory_space<vmem>>, vector<1x8x128xf32>,
    return
  }
  func.func @transform_0(%arg0: i32, %arg1: i32) -> (i32, i32, i32) {
    %c0_i32 = arith.constant 0 : i32
    %c0_i32_0 = arith.constant 0 : i32
    return %arg0, %c0_i32, %arg1 : i32, i32, i32
  }
  func.func @transform_1(%arg0: i32, %arg1: i32) -> (i32, i32) {
    %c0_i32 = arith.constant 0 : i32
    %c0_i32_0 = arith.constant 0 : i32
    %c0_i32_1 = arith.constant 0 : i32
    return %c0_i32, %c0_i32_0 : i32, i32
  }
  func.func @transform_2(%arg0: i32, %arg1: i32) -> (i32, i32) {
    %c0_i32 = arith.constant 0 : i32
    %c0_i32_0 = arith.constant 0 : i32
    %c0_i32_1 = arith.constant 0 : i32
    return %c0_i32, %c0_i32_0 : i32, i32
  }
  func.func @transform_3(%arg0: i32, %arg1: i32) -> (i32, i32) {
    %c0_i32 = arith.constant 0 : i32
    %c0_i32_0 = arith.constant 0 : i32
    %c0_i32_1 = arith.constant 0 : i32
    return %c0_i32, %c0_i32_0 : i32, i32
  }
  func.func @transform_4(%arg0: i32, %arg1: i32) -> (i32, i32) {
    %c0_i32 = arith.constant 0 : i32
    %c0_i32_0 = arith.constant 0 : i32
    %c0_i32_1 = arith.constant 0 : i32
    return %c0_i32, %c0_i32_0 : i32, i32
  }
  func.func @transform_5(%arg0: i32, %arg1: i32) -> (i32, i32, i32) {
    %c0_i32 = arith.constant 0 : i32
    %c0_i32_0 = arith.constant 0 : i32
    return %arg0, %c0_i32, %arg1 : i32, i32, i32
  }
}

</mosaic_0001>

<llo_original>
// kernel: tpu_custom_call.1
$region0: #{tpu_custom_call.1}
  #allocation0 [shape = 'u32[]', space=smem, size = 0x4, offset = 0x4, fixed_abs, tag = 'smem constant byte address 0x4 - core index']
  #allocation1 [shape = 'u32[144,128]{1,0:T(1,128)}', space=vmem, size = 0x12000, scoped, tag = 'internal scratch']
  %s0 = inlined_call_operand.vmem [shape: f32[2,8,256], index: 0, kind: input, shape index: {}]
  %s1 = inlined_call_operand.vmem [shape: f32[16,8], index: 1, kind: input, shape index: {}]
  %s2 = inlined_call_operand.vmem [shape: f32[16,1], index: 2, kind: input, shape index: {}]
  %s3 = inlined_call_operand.vmem [shape: f32[8,16], index: 3, kind: input, shape index: {}]
  %s4 = inlined_call_operand.vmem [shape: f32[8,1], index: 4, kind: input, shape index: {}]
  %s5 = inlined_call_operand.hbm [shape: f32[2,8,256], index: 5, kind: output, shape index: {}]
  %s6 = sld [smem:[#allocation0]]
  $region53: #{tpu_custom_call.1} parent=0
    _
  %s8 = ssub.s32 1, %s6
  %s9 = scalar_select 0, %s8, %s6
  $region1: #{tpu_custom_call.1} parent=0
    #allocation2 [shape = 'u8[8192]{0}', space=vmem, size = 0x2000, scoped, tag = 'output window, operand 0']
    #allocation3 [shape = 's32[2]{0}', space=sflag, size = 0x8, scoped, tag = 'scoped memory for tpu_custom_call.1']
    %10 = vsyncpa [#allocation3], 0
    %s11 = scalar_lea.sflag [#allocation3], 1
    %12 = vsyncpa %s11, 0
    loop: start=0, step=1, limit=6
    $region2: #{tpu_custom_call.1} parent=1 // loop_pre_header
      _
    $region3: #{tpu_custom_call.1} parent=1 // loop_header
      %s14 = sphi 0, %s18
      %p15 = scmp.ge.s32.totalorder %s14, 6
      %s21 = sphi 0, %s33
      %s22 = sphi 0, %s29
      %s23 = sphi 0, %s21
      %s24 = sphi 0, %s22
      %s25 = sphi 0, %s23
      %s26 = sphi 0, %s24
      %s38 = sphi 0, %s40
      %s41 = sphi 0, %s38
      %s42 = sphi 0, %s41
      %s58 = sphi 0, %s42
      %s62 = sphi 0, %s62
      %s64 = sphi 0, %s62
      %s65 = sphi 0, %s64
      %s79 = sphi 0, %s65
      %s83 = sphi 0, %s83
      %s85 = sphi 0, %s83
      %s86 = sphi 0, %s85
      %s100 = sphi 0, %s86
      %s104 = sphi 0, %s104
      %s106 = sphi 0, %s104
      %s107 = sphi 0, %s106
      %s121 = sphi 0, %s107
      %s125 = sphi 0, %s125
      %s127 = sphi 0, %s125
      %s128 = sphi 0, %s127
      %s142 = sphi 0, %s128
      %s150 = sphi 0, %s152
      %s153 = sphi 0, %s150
      %s154 = sphi 0, %s153
      %s170 = sphi 0, %s154
    $region4: #{tpu_custom_call.1} parent=1 // loop_header_branch
      %17 = sbr.rel (%p15) target = $region8
    $region5: #{tpu_custom_call.1} parent=1 // loop_body
      %s19 = ssub.s32 %s14, 1
      %s20 = ssub.s32 %s14, 2
      %s27 = sadd.s32 1, %s22
      %p28 = scmp.ge.s32.totalorder %s27, 2
      %s29 = scalar_select %p28, 0, %s27
      %s30 = sadd.s32 1, %s21
      %s31 = scalar_select %p28, %s30, %s21
      %p32 = scmp.ge.s32.totalorder %s31, 2
      %s33 = scalar_select %p32, 0, %s31
      %s34 = ssub.s32 %s21, %s33
      %s35 = ssub.s32 %s22, %s29
      %s36 = sor.u32 %s34, %s35
      %p37 = scmp.eq.s32.totalorder %s36, 0
      %s39 = sadd.s32 %s38, 1
      %s40 = scalar_select %p37, %s38, %s39
      %p43 = pneg %p37
      %p44 = scmp.eq.s32.totalorder %s14, 3
      %p45 = por %p43, %p44
      %p46 = scmp.ne.s32.totalorder %s38, %s41
      %p47 = scmp.eq.s32.totalorder %s14, 0
      %p48 = por %p46, %p47
      %p49 = scmp.ne.s32.totalorder %s38, %s41
      %p50 = scmp.eq.s32.totalorder %s19, 3
      %p51 = por %p49, %p50
      %p52 = scmp.ne.s32.totalorder %s41, %s42
      %p53 = scmp.eq.s32.totalorder %s19, 0
      %p54 = por %p52, %p53
      %p55 = scmp.ne.s32.totalorder %s41, %s42
      %p56 = scmp.eq.s32.totalorder %s20, 3
      %p57 = por %p55, %p56
      %p59 = scmp.ne.s32.totalorder %s42, %s58
      %p60 = scmp.eq.s32.totalorder %s20, 0
      %p61 = por %p59, %p60
      %s63 = sadd.s32 %s62, 1
      %p66 = scmp.eq.s32.totalorder %s14, 3
      %p67 = scmp.ne.s32.totalorder %s62, %s64
      %p68 = scmp.eq.s32.totalorder %s14, 0
      %p69 = por %p67, %p68
      %p70 = scmp.ne.s32.totalorder %s62, %s64
      %p71 = scmp.eq.s32.totalorder %s19, 3
      %p72 = por %p70, %p71
      %p73 = scmp.ne.s32.totalorder %s64, %s65
      %p74 = scmp.eq.s32.totalorder %s19, 0
      %p75 = por %p73, %p74
      %p76 = scmp.ne.s32.totalorder %s64, %s65
      %p77 = scmp.eq.s32.totalorder %s20, 3
      %p78 = por %p76, %p77
      %p80 = scmp.ne.s32.totalorder %s65, %s79
      %p81 = scmp.eq.s32.totalorder %s20, 0
      %p82 = por %p80, %p81
      %s84 = sadd.s32 %s83, 1
      %p87 = scmp.eq.s32.totalorder %s14, 3
      %p88 = scmp.ne.s32.totalorder %s83, %s85
      %p89 = scmp.eq.s32.totalorder %s14, 0
      %p90 = por %p88, %p89
      %p91 = scmp.ne.s32.totalorder %s83, %s85
      %p92 = scmp.eq.s32.totalorder %s19, 3
      %p93 = por %p91, %p92
      %p94 = scmp.ne.s32.totalorder %s85, %s86
      %p95 = scmp.eq.s32.totalorder %s19, 0
      %p96 = por %p94, %p95
      %p97 = scmp.ne.s32.totalorder %s85, %s86
      %p98 = scmp.eq.s32.totalorder %s20, 3
      %p99 = por %p97, %p98
      %p101 = scmp.ne.s32.totalorder %s86, %s100
      %p102 = scmp.eq.s32.totalorder %s20, 0
      %p103 = por %p101, %p102
      %s105 = sadd.s32 %s104, 1
      %p108 = scmp.eq.s32.totalorder %s14, 3
      %p109 = scmp.ne.s32.totalorder %s104, %s106
      %p110 = scmp.eq.s32.totalorder %s14, 0
      %p111 = por %p109, %p110
      %p112 = scmp.ne.s32.totalorder %s104, %s106
      %p113 = scmp.eq.s32.totalorder %s19, 3
      %p114 = por %p112, %p113
      %p115 = scmp.ne.s32.totalorder %s106, %s107
      %p116 = scmp.eq.s32.totalorder %s19, 0
      %p117 = por %p115, %p116
      %p118 = scmp.ne.s32.totalorder %s106, %s107
      %p119 = scmp.eq.s32.totalorder %s20, 3
      %p120 = por %p118, %p119
      %p122 = scmp.ne.s32.totalorder %s107, %s121
      %p123 = scmp.eq.s32.totalorder %s20, 0
      %p124 = por %p122, %p123
      %s126 = sadd.s32 %s125, 1
      %p129 = scmp.eq.s32.totalorder %s14, 3
      %p130 = scmp.ne.s32.totalorder %s125, %s127
      %p131 = scmp.eq.s32.totalorder %s14, 0
      %p132 = por %p130, %p131
      %p133 = scmp.ne.s32.totalorder %s125, %s127
      %p134 = scmp.eq.s32.totalorder %s19, 3
      %p135 = por %p133, %p134
      %p136 = scmp.ne.s32.totalorder %s127, %s128
      %p137 = scmp.eq.s32.totalorder %s19, 0
      %p138 = por %p136, %p137
      %p139 = scmp.ne.s32.totalorder %s127, %s128
      %p140 = scmp.eq.s32.totalorder %s20, 3
      %p141 = por %p139, %p140
      %p143 = scmp.ne.s32.totalorder %s128, %s142
      %p144 = scmp.eq.s32.totalorder %s20, 0
      %p145 = por %p143, %p144
      %s146 = ssub.s32 %s21, %s33
      %s147 = ssub.s32 %s22, %s29
      %s148 = sor.u32 %s146, %s147
      %p149 = scmp.eq.s32.totalorder %s148, 0
      %s151 = sadd.s32 %s150, 1
      %s152 = scalar_select %p149, %s150, %s151
      %p155 = pneg %p149
      %p156 = scmp.eq.s32.totalorder %s14, 3
      %p157 = por %p155, %p156
      %p158 = scmp.ne.s32.totalorder %s150, %s153
      %p159 = scmp.eq.s32.totalorder %s14, 0
      %p160 = por %p158, %p159
      %p161 = scmp.ne.s32.totalorder %s150, %s153
      %p162 = scmp.eq.s32.totalorder %s19, 3
      %p163 = por %p161, %p162
      %p164 = scmp.ne.s32.totalorder %s153, %s154
      %p165 = scmp.eq.s32.totalorder %s19, 0
      %p166 = por %p164, %p165
      %p167 = scmp.ne.s32.totalorder %s153, %s154
      %p168 = scmp.eq.s32.totalorder %s20, 3
      %p169 = por %p167, %p168
      %p171 = scmp.ne.s32.totalorder %s154, %s170
      %p172 = scmp.eq.s32.totalorder %s20, 0
      %p173 = por %p171, %p172
      %p174 = scmp.le.s32.totalorder 1, %s14
      %p175 = scmp.lt.s32.totalorder %s14, 5
      %p176 = pnand %p174, %p175
      %p177 = pneg %p176
      // Predicated region
      $region9: #{tpu_custom_call.1} parent=5 // pred_check
        _
      $region10: #{tpu_custom_call.1} parent=5 // pred_check_branch
        %179 = sbr.rel (%p176) target = $region12
      $region11: #{tpu_custom_call.1} parent=5 // pred_region
        %s180 = ssub.s32 %s14, 1
        // Predicated region
        $region13: #{tpu_custom_call.1} parent=11 // pred_check
          %p181 = pneg %p75
        $region14: #{tpu_custom_call.1} parent=11 // pred_check_branch
          %183 = sbr.rel (%p181) target = $region16
        $region15: #{tpu_custom_call.1} parent=11 // pred_region
          _
        $region16: #{tpu_custom_call.1} parent=11 // pred_fallthru
          _
        // Predicated region
        $region17: #{tpu_custom_call.1} parent=11 // pred_check
          %p184 = pneg %p96
        $region18: #{tpu_custom_call.1} parent=11 // pred_check_branch
          %186 = sbr.rel (%p184) target = $region20
        $region19: #{tpu_custom_call.1} parent=11 // pred_region
          _
        $region20: #{tpu_custom_call.1} parent=11 // pred_fallthru
          _
        // Predicated region
        $region21: #{tpu_custom_call.1} parent=11 // pred_check
          %p187 = pneg %p117
        $region22: #{tpu_custom_call.1} parent=11 // pred_check_branch
          %189 = sbr.rel (%p187) target = $region24
        $region23: #{tpu_custom_call.1} parent=11 // pred_region
          _
        $region24: #{tpu_custom_call.1} parent=11 // pred_fallthru
          _
        // Predicated region
        $region25: #{tpu_custom_call.1} parent=11 // pred_check
          %p190 = pneg %p138
        $region26: #{tpu_custom_call.1} parent=11 // pred_check_branch
          %192 = sbr.rel (%p190) target = $region28
        $region27: #{tpu_custom_call.1} parent=11 // pred_region
          _
        $region28: #{tpu_custom_call.1} parent=11 // pred_fallthru
          _
      $region12: #{tpu_custom_call.1} parent=5 // pred_fallthru
        _
      %p193 = scmp.lt.s32.totalorder %s14, 4
      // Predicated region
      $region29: #{tpu_custom_call.1} parent=5 // pred_check
        %p194 = pneg %p193
      $region30: #{tpu_custom_call.1} parent=5 // pred_check_branch
        %196 = sbr.rel (%p194) target = $region32
      $region31: #{tpu_custom_call.1} parent=5 // pred_region
        // Predicated region
        $region33: #{tpu_custom_call.1} parent=31 // pred_check
          %p197 = pneg %p48
        $region34: #{tpu_custom_call.1} parent=31 // pred_check_branch
          %199 = sbr.rel (%p197) target = $region36
        $region35: #{tpu_custom_call.1} parent=31 // pred_region
          %p200 = scmp.lt.s32.totalorder %s21, 1
          %s201 = scalar_select %p200, %s21, 1
          %p202 = scmp.lt.s32.totalorder %s22, 1
          %s203 = scalar_select %p202, %s22, 1
          %s204 = smul.addr %s201, 2
          %s205 = sadd.s32 %s203, %s204
          %s206 = smul.addr %s205, 8
          %s207 = scalar_lea.vmem %s0, %s206
        $region36: #{tpu_custom_call.1} parent=31 // pred_fallthru
          _
      $region32: #{tpu_custom_call.1} parent=5 // pred_fallthru
        _
      %p208 = scmp.le.s32.totalorder 1, %s14
      %p209 = scmp.lt.s32.totalorder %s14, 5
      %p210 = pnand %p208, %p209
      %p211 = pneg %p210
      // Predicated region
      $region37: #{tpu_custom_call.1} parent=5 // pred_check
        _
      $region38: #{tpu_custom_call.1} parent=5 // pred_check_branch
        %213 = sbr.rel (%p210) target = $region40
      $region39: #{tpu_custom_call.1} parent=5 // pred_region
        %s214 = ssub.s32 %s14, 1
        %p215 = scmp.lt.s32.totalorder %s23, 1
        %s216 = scalar_select %p215, %s23, 1
        %p217 = scmp.lt.s32.totalorder %s24, 1
        %s218 = scalar_select %p217, %s24, 1
        %s219 = smul.addr %s216, 2
        %s220 = sadd.s32 %s218, %s219
        %s221 = smul.addr %s220, 8
        %s222 = scalar_lea.vmem %s0, %s221
        %p223 = pneg %p54
        %p224 = pneg %p51
        %p225 = pneg %p75
        %p226 = pneg %p72
        %p227 = pneg %p96
        %p228 = pneg %p93
        %p229 = pneg %p117
        %p230 = pneg %p114
        %p231 = pneg %p138
        %p232 = pneg %p135
        %p233 = pneg %p166
        %p234 = pneg %p163
        %s235 = sand.u32 %s153, 1
        %s236 = scalar_lea.sflag [#allocation3], %s235
        %s237 = sand.u32 %s153, 1
        %s238 = smul.addr %s237, 8
        %s239 = scalar_lea.vmem [#allocation2], %s238
        %p240 = scmp.lt.s32.totalorder %s23, 1
        %s241 = scalar_select %p240, %s23, 1
        %p242 = scmp.lt.s32.totalorder %s24, 1
        %s243 = scalar_select %p242, %s24, 1
        %s244 = smul.addr %s241, 2
        %s245 = sadd.s32 %s243, %s244
        %s246 = smul.addr %s245, 8
        %s247 = scalar_lea.vmem %s0, %s246
        %v248 = vld [vmem:[%s247] sm:$0xff]
        %v249 = vld [vmem:[%s1] sm:$0xff]
        %v250 = vld [vmem:[%s1 + $0x8] sm:$0xff]
        %v251 = vld [vmem:[%s2] sm:$0xff]
        %v252 = vld [vmem:[%s2 + $0x8] sm:$0xff]
        %254 = vset.pattern.permute.xlu0 0
        %255 = vperm.xlu0 %254, %v251
        %v256 = vpop.permute.xlu0 %255
        %259 = vset.pattern.permute.xlu0 0
        %260 = vperm.xlu0 %259, %v252
        %v261 = vpop.permute.xlu0 %260
        %vm263 = vcmask 64512
        %v265 = vsel %vm263, %v249, 0
        %v268 = vsel %vm263, %v250, 0
        %270 = vmatprep.subr.mxu0 0.0
        %271 = vmatpush1.msra.mxu0 %v248
        %272 = vmatprep.subr.mxu0 0.0
        %273 = vmatpush1.msra.mxu0 0.0
        %274 = vmatprep.subr.mxu0 0.0
        %275 = vmatpush1.msra.mxu0 0.0
        %276 = vmatprep.subr.mxu0 0.0
        %277 = vmatpush1.msra.mxu0 0.0
        %278 = vmatprep.subr.mxu0 0.0
        %279 = vmatpush1.msra.mxu0 0.0
        %280 = vmatprep.subr.mxu0 0.0
        %281 = vmatpush1.msra.mxu0 0.0
        %282 = vmatprep.subr.mxu0 0.0
        %283 = vmatpush1.msra.mxu0 0.0
        %284 = vmatprep.subr.mxu0 0.0
        %285 = vmatpush1.msra.mxu0 0.0
        %286 = vmatprep.subr.mxu0 0.0
        %287 = vmatpush1.msra.mxu0 0.0
        %288 = vmatprep.subr.mxu0 0.0
        %289 = vmatpush1.msra.mxu0 0.0
        %290 = vmatprep.subr.mxu0 0.0
        %291 = vmatpush1.msra.mxu0 0.0
        %292 = vmatprep.subr.mxu0 0.0
        %293 = vmatpush1.msra.mxu0 0.0
        %294 = vmatprep.subr.mxu0 0.0
        %295 = vmatpush1.msra.mxu0 0.0
        %296 = vmatprep.subr.mxu0 0.0
        %297 = vmatpush1.msra.mxu0 0.0
        %298 = vmatprep.subr.mxu0 0.0
        %299 = vmatpush1.msra.mxu0 0.0
        %300 = vmatprep.subr.mxu0 0.0
        %301 = vmatpush1.msra.mxu0 0.0
        %302 = vmatprep.subr.mxu0 0.0
        %303 = vmatpush1.msra.mxu0 0.0
        %304 = vmatprep.subr.mxu0 0.0
        %305 = vmatpush1.msra.mxu0 0.0
        %306 = vmatprep.subr.mxu0 0.0
        %307 = vmatpush1.msra.mxu0 0.0
        %308 = vmatprep.subr.mxu0 0.0
        %309 = vmatpush1.msra.mxu0 0.0
        %310 = vmatprep.subr.mxu0 0.0
        %311 = vmatpush1.msra.mxu0 0.0
        %312 = vmatprep.subr.mxu0 0.0
        %313 = vmatpush1.msra.mxu0 0.0
        %314 = vmatprep.subr.mxu0 0.0
        %315 = vmatpush1.msra.mxu0 0.0
        %316 = vmatprep.subr.mxu0 0.0
        %317 = vmatpush1.msra.mxu0 0.0
        %318 = vmatprep.subr.mxu0 0.0
        %319 = vmatpush1.msra.mxu0 0.0
        %320 = vmatprep.subr.mxu0 0.0
        %321 = vmatpush1.msra.mxu0 0.0
        %322 = vmatprep.subr.mxu0 0.0
        %323 = vmatpush1.msra.mxu0 0.0
        %324 = vmatprep.subr.mxu0 0.0
        %325 = vmatpush1.msra.mxu0 0.0
        %326 = vmatprep.subr.mxu0 0.0
        %327 = vmatpush1.msra.mxu0 0.0
        %328 = vmatprep.subr.mxu0 0.0
        %329 = vmatpush1.msra.mxu0 0.0
        %330 = vmatprep.subr.mxu0 0.0
        %331 = vmatpush1.msra.mxu0 0.0
        %332 = vmatprep.subr.mxu0 0.0
        %333 = vmatpush1.msra.mxu0 0.0
        %334 = vmatprep.mubr.f32.mxu0 0.0
        %335 = vmatmul.mubr.f32.gmra.mrb[0].mxu0 %v265
        %v336 = vpop.f32.mrb[0].mxu0
        %v337 = vadd.f32 %v256, %v336
        %v338 = vpop.f32.mrb[0].mxu0
        %339 = vmatprep.mubr.f32.mxu0 0.0
        %340 = vmatmul.mubr.f32.gmra.mrb[0].mxu0 %v268
        %v341 = vpop.f32.mrb[0].mxu0
        %v342 = vadd.f32 %v261, %v341
        %v343 = vpop.f32.mrb[0].mxu0
        %344 = vdwg.mxu0
        %v345 = vmax.f32 %v337, 0.0
        %v346 = vmax.f32 %v342, 0.0
        %v347 = vld [vmem:[%s3] sm:$0xff]
        %v348 = vld [vmem:[%s4] sm:$0xff]
        %350 = vset.pattern.permute.xlu0 0
        %351 = vperm.xlu0 %350, %v348
        %v352 = vpop.permute.xlu0 %351
        %vm354 = vcmask 130048
        %v356 = vsel %vm354, %v347, 0
        %358 = vmatprep.subr.mxu0 0.0
        %359 = vmatpush1.msra.mxu0 %v345
        %360 = vmatprep.subr.mxu0 0.0
        %361 = vmatpush1.msra.mxu0 %v346
        %362 = vmatprep.subr.mxu0 0.0
        %363 = vmatpush1.msra.mxu0 0.0
        %364 = vmatprep.subr.mxu0 0.0
        %365 = vmatpush1.msra.mxu0 0.0
        %366 = vmatprep.subr.mxu0 0.0
        %367 = vmatpush1.msra.mxu0 0.0
        %368 = vmatprep.subr.mxu0 0.0
        %369 = vmatpush1.msra.mxu0 0.0
        %370 = vmatprep.subr.mxu0 0.0
        %371 = vmatpush1.msra.mxu0 0.0
        %372 = vmatprep.subr.mxu0 0.0
        %373 = vmatpush1.msra.mxu0 0.0
        %374 = vmatprep.subr.mxu0 0.0
        %375 = vmatpush1.msra.mxu0 0.0
        %376 = vmatprep.subr.mxu0 0.0
        %377 = vmatpush1.msra.mxu0 0.0
        %378 = vmatprep.subr.mxu0 0.0
        %379 = vmatpush1.msra.mxu0 0.0
        %380 = vmatprep.subr.mxu0 0.0
        %381 = vmatpush1.msra.mxu0 0.0
        %382 = vmatprep.subr.mxu0 0.0
        %383 = vmatpush1.msra.mxu0 0.0
        %384 = vmatprep.subr.mxu0 0.0
        %385 = vmatpush1.msra.mxu0 0.0
        %386 = vmatprep.subr.mxu0 0.0
        %387 = vmatpush1.msra.mxu0 0.0
        %388 = vmatprep.subr.mxu0 0.0
        %389 = vmatpush1.msra.mxu0 0.0
        %390 = vmatprep.subr.mxu0 0.0
        %391 = vmatpush1.msra.mxu0 0.0
        %392 = vmatprep.subr.mxu0 0.0
        %393 = vmatpush1.msra.mxu0 0.0
        %394 = vmatprep.subr.mxu0 0.0
        %395 = vmatpush1.msra.mxu0 0.0
        %396 = vmatprep.subr.mxu0 0.0
        %397 = vmatpush1.msra.mxu0 0.0
        %398 = vmatprep.subr.mxu0 0.0
        %399 = vmatpush1.msra.mxu0 0.0
        %400 = vmatprep.subr.mxu0 0.0
        %401 = vmatpush1.msra.mxu0 0.0
        %402 = vmatprep.subr.mxu0 0.0
        %403 = vmatpush1.msra.mxu0 0.0
        %404 = vmatprep.subr.mxu0 0.0
        %405 = vmatpush1.msra.mxu0 0.0
        %406 = vmatprep.subr.mxu0 0.0
        %407 = vmatpush1.msra.mxu0 0.0
        %408 = vmatprep.subr.mxu0 0.0
        %409 = vmatpush1.msra.mxu0 0.0
        %410 = vmatprep.subr.mxu0 0.0
        %411 = vmatpush1.msra.mxu0 0.0
        %412 = vmatprep.subr.mxu0 0.0
        %413 = vmatpush1.msra.mxu0 0.0
        %414 = vmatprep.subr.mxu0 0.0
        %415 = vmatpush1.msra.mxu0 0.0
        %416 = vmatprep.subr.mxu0 0.0
        %417 = vmatpush1.msra.mxu0 0.0
        %418 = vmatprep.subr.mxu0 0.0
        %419 = vmatpush1.msra.mxu0 0.0
        %420 = vmatprep.subr.mxu0 0.0
        %421 = vmatpush1.msra.mxu0 0.0
        %422 = vmatprep.mubr.f32.mxu0 0.0
        %423 = vmatmul.mubr.f32.gmra.mrb[0].mxu0 %v356
        %v424 = vpop.f32.mrb[0].mxu0
        %v425 = vadd.f32 %v352, %v424
        %v426 = vpop.f32.mrb[0].mxu0
        %427 = vdwg.mxu0
        %v428 = vadd.f32 %v425, %v248
        %429 = vst [vmem:[%s239] sm:$0xff] %v428
        %s430 = sand.u32 %s153, 1
        %s431 = scalar_lea.sflag [#allocation3], %s430
        %s432 = sand.u32 %s153, 1
        %s433 = smul.addr %s432, 8
        %s434 = scalar_lea.vmem [#allocation2], %s433
        // Predicated region
        $region41: #{tpu_custom_call.1} parent=39 // pred_check
          %p435 = pneg %p163
        $region42: #{tpu_custom_call.1} parent=39 // pred_check_branch
          %437 = sbr.rel (%p435) target = $region44
        $region43: #{tpu_custom_call.1} parent=39 // pred_region
          %s439 = ssub.s32 128, 128
          %440 = vsyncadd %s431, %s439
          %s441 = smul.addr %s23, 2
          %s442 = sadd.s32 %s24, %s441
          %s443 = smul.addr %s442, 128
          %s444 = scalar_lea.hbm %s5, %s443
          %s446 = sshll.u32 %s434, 4
          %s447 = int_to_ptr.vmem [resolvable:$true] %s446
          %449 = dma.vmem_to_hbm [thread:$0]  %s447, 128, %s444, %s431
        $region44: #{tpu_custom_call.1} parent=39 // pred_fallthru
          _
      $region40: #{tpu_custom_call.1} parent=5 // pred_fallthru
        _
      %p450 = scmp.le.s32.totalorder 2, %s14
      // Predicated region
      $region45: #{tpu_custom_call.1} parent=5 // pred_check
        %p451 = pneg %p450
      $region46: #{tpu_custom_call.1} parent=5 // pred_check_branch
        %453 = sbr.rel (%p451) target = $region48
      $region47: #{tpu_custom_call.1} parent=5 // pred_region
        %s454 = ssub.s32 %s14, 2
        // Predicated region
        $region49: #{tpu_custom_call.1} parent=47 // pred_check
          %p455 = pneg %p169
        $region50: #{tpu_custom_call.1} parent=47 // pred_check_branch
          %457 = sbr.rel (%p455) target = $region52
        $region51: #{tpu_custom_call.1} parent=47 // pred_region
          %s458 = sand.u32 %s154, 1
          %s459 = scalar_lea.sflag [#allocation3], %s458
          %s460 = sand.u32 %s154, 1
          %s461 = smul.addr %s460, 8
          %s462 = scalar_lea.vmem [#allocation2], %s461
          %463 = dma.done %s459, 128
        $region52: #{tpu_custom_call.1} parent=47 // pred_fallthru
          _
      $region48: #{tpu_custom_call.1} parent=5 // pred_fallthru
        _
    $region6: #{tpu_custom_call.1} parent=1 // loop_footer
      %s18 = sadd.s32 1, %s14
    $region7: #{tpu_custom_call.1} parent=1 // loop_footer_branch
      %13 = sbr.rel target = $region3
    $region8: #{tpu_custom_call.1} parent=1 // loop_exit
      _
    %464 = vsyncpa [#allocation3], 1
    %s465 = scalar_lea.sflag [#allocation3], 1
    %466 = vsyncpa %s465, 1

</llo_original>
